<compile_context>
chip_gen: v5e
topology: v5e:2x2
jax: 0.10.0
libtpu: 0.0.40
codegen_flags: <defaults>
</compile_context>

<pallas_src>
import functools
import math

import jax
import jax.numpy as jnp
from jax.experimental import pallas as pl
from jax.experimental.pallas import tpu as pltpu

EPS = 1e-5
NEG_SLOPE = 0.01


def _round_up(a: int, b: int) -> int:
    return (a + b - 1) // b * b


def _vmem_budget():
    """Generation-aware VMEM budgets (v7x: 64 MiB physical, v5e/v6e: 128 MiB)."""
    cap = 64 * 1024 * 1024
    try:
        cap = int(pltpu.get_tpu_info().vmem_capacity_bytes)
    except Exception:
        pass
    tile_budget = max(8 << 20, min(cap // 4, 32 << 20))
    vmem_limit = max(32 << 20, min(cap * 3 // 4, 96 << 20))
    return tile_budget, vmem_limit


def _choose_spatial_tile(hw: int, kpad: int, o: int, tile_budget: int):
    """Pick the spatial (lane) tile `thw` and padded per-batch spatial size HWp."""
    # Double-buffered, index-varying tiles: patches (kpad, thw) bf16 + out (o, thw) f32.
    per_col = 2 * (kpad * 2) + 2 * (o * 4)
    avail = max(tile_budget - 4 * o * kpad, 1 << 20)   # weight block stays resident
    thw_max = max(128, avail // max(per_col, 1))
    if hw <= thw_max:
        return hw, hw                       # one full-spatial tile per batch, no padding
    cap = max(128, (thw_max // 128) * 128)
    for t in range(cap, 127, -128):         # prefer a 128-multiple that divides HW
        if hw % t == 0:
            return t, hw
    return cap, _round_up(hw, cap)          # fall back to padded spatial columns


def _conv_bn_lrelu_kernel(p_ref, w_ref, g_ref, b_ref, o_ref,
                          sum_ref, sq_ref, scale_ref, shift_ref, *, inv_m):
    ph = pl.program_id(0)                       # 0 = stats pass, 1 = write pass
    n = pl.program_id(1)                        # batch
    i = pl.program_id(2)                        # spatial tile within batch
    is_first = jnp.logical_and(n == 0, i == 0)
    is_last = jnp.logical_and(n == pl.num_programs(1) - 1,
                              i == pl.num_programs(2) - 1)

    # Conv as matmul on the MXU: (O, Kpad) @ (Kpad, thw) -> (O, thw), f32 acc.
    acc = jnp.dot(w_ref[...], p_ref[0], preferred_element_type=jnp.float32)

    @pl.when(ph == 0)
    def _():                                    # statistics pass
        @pl.when(is_first)
        def _():
            sum_ref[...] = jnp.zeros_like(sum_ref)
            sq_ref[...] = jnp.zeros_like(sq_ref)

        sum_ref[...] += jnp.sum(acc, axis=1, keepdims=True)
        sq_ref[...] += jnp.sum(acc * acc, axis=1, keepdims=True)

        @pl.when(is_last)
        def _():
            mean = sum_ref[...] * inv_m
            var = jnp.maximum(sq_ref[...] * inv_m - mean * mean, 0.0)
            scale = g_ref[...] * jax.lax.rsqrt(var + EPS)
            scale_ref[...] = scale
            shift_ref[...] = b_ref[...] - mean * scale

    @pl.when(ph == 1)
    def _():                                    # recompute + normalize + LeakyReLU
        y = acc * scale_ref[...] + shift_ref[...]
        o_ref[0] = jnp.where(y >= 0.0, y, NEG_SLOPE * y).astype(o_ref.dtype)


def conv_block_forward(x_nchw, weight, gamma, beta):
    """x_nchw: (N, C, H, W) f32; weight: (O, C, 3, 3); gamma/beta: (O,). Returns NCHW f32."""
    N, C, H, W = x_nchw.shape
    O = weight.shape[0]
    Ho = (H + 2 - 3) // 2 + 1
    Wo = (W + 2 - 3) // 2 + 1
    HW = Ho * Wo
    M = N * HW
    K = 9 * C
    Kpad = _round_up(K, 16)        # bf16 packing granularity only (never 128)

    tile_budget, vmem_limit = _vmem_budget()
    thw, HWp = _choose_spatial_tile(HW, Kpad, O, tile_budget)
    n_hw = HWp // thw
    grid = (2, N, n_hw)            # (pass, batch, spatial tile)

    # --- glue: transpose-free, K-major im2col straight from NCHW (bf16). ---
    xb = x_nchw.astype(jnp.bfloat16)
    xp = jnp.pad(xb, ((0, 0), (0, 0), (1, 1), (1, 1)))
    taps = [xp[:, :, kh:kh + 2 * Ho:2, kw:kw + 2 * Wo:2]      # (N, C, Ho, Wo)
            for kh in range(3) for kw in range(3)]
    if Kpad > K:
        taps.append(jnp.zeros((N, Kpad - K, Ho, Wo), jnp.bfloat16))
    patches = jnp.concatenate(taps, axis=1).reshape(N, Kpad, HW)   # no-op reshape
    if HWp > HW:
        patches = jnp.pad(patches, ((0, 0), (0, 0), (0, HWp - HW)))  # zero cols -> zero stats

    # weight -> (O, Kpad) with feature index (kh*3 + kw)*C + c (matches the concat order).
    w2d = weight.astype(jnp.bfloat16).transpose(0, 2, 3, 1).reshape(O, K)
    if Kpad > K:
        w2d = jnp.pad(w2d, ((0, 0), (0, Kpad - K)))
    g2d = gamma.astype(jnp.float32).reshape(O, 1)
    b2d = beta.astype(jnp.float32).reshape(O, 1)

    out = pl.pallas_call(
        functools.partial(_conv_bn_lrelu_kernel, inv_m=1.0 / float(M)),
        out_shape=jax.ShapeDtypeStruct((N, O, HWp), jnp.float32),
        grid_spec=pltpu.PrefetchScalarGridSpec(
            num_scalar_prefetch=0,
            grid=grid,
            in_specs=[
                pl.BlockSpec((1, Kpad, thw), lambda p, n, i: (n, 0, i)),
                pl.BlockSpec((O, Kpad), lambda p, n, i: (0, 0)),
                pl.BlockSpec((O, 1), lambda p, n, i: (0, 0)),
                pl.BlockSpec((O, 1), lambda p, n, i: (0, 0)),
            ],
            # Constant block (0,0,0) during the stats pass keeps the output
            # resident in VMEM (no garbage write-backs); real blocks in pass 1.
            out_specs=pl.BlockSpec((1, O, thw), lambda p, n, i: (n * p, 0, i * p)),
            scratch_shapes=[
                pltpu.VMEM((O, 1), jnp.float32),   # per-channel sum
                pltpu.VMEM((O, 1), jnp.float32),   # per-channel sum of squares
                pltpu.VMEM((O, 1), jnp.float32),   # scale = gamma * rsqrt(var + eps)
                pltpu.VMEM((O, 1), jnp.float32),   # shift = beta - mean * scale
            ],
        ),
        compiler_params=pltpu.CompilerParams(
            dimension_semantics=("arbitrary", "arbitrary", "arbitrary"),
            vmem_limit_bytes=vmem_limit,
        ),
        cost_estimate=pl.CostEstimate(
            flops=2 * 2 * N * HWp * Kpad * O,
            transcendentals=0,
            bytes_accessed=(2 * N * Kpad * HWp * 2 + O * Kpad * 2
                            + N * O * HWp * 4 + 4 * O * 4),
        ),
    )(patches, w2d, g2d, b2d)

    if HWp > HW:
        out = out[:, :, :HW]
    return out.reshape(N, O, Ho, Wo)     # already NCHW; no transpose needed


def _reference(x, weight, gamma, beta):
    y = jax.lax.conv_general_dilated(
        x, weight, window_strides=(2, 2), padding=((1, 1), (1, 1)),
        dimension_numbers=("NCHW", "OIHW", "NCHW"))
    mean = y.mean(axis=(0, 2, 3), keepdims=True)
    var = y.var(axis=(0, 2, 3), keepdims=True)   # biased, like PyTorch BN normalization
    yn = (y - mean) / jnp.sqrt(var + EPS)
    yn = yn * gamma.reshape(1, -1, 1, 1) + beta.reshape(1, -1, 1, 1)
    return jnp.where(yn >= 0, yn, NEG_SLOPE * yn)


if __name__ == "__main__":
    key = jax.random.PRNGKey(0)
    k_x, k_w, k_g, k_b = jax.random.split(key, 4)

    N, C, O, H, W = 2, 4, 8, 16, 16
    x = jax.random.normal(k_x, (N, C, H, W), dtype=jnp.float32)
    # Deterministic synthetic params (shapes per nn.Conv2d(C, O, 3) / BatchNorm2d(O)).
    fan_in = C * 3 * 3
    bound = 1.0 / math.sqrt(fan_in)
    weight = jax.random.uniform(k_w, (O, C, 3, 3), jnp.float32, -bound, bound)
    gamma = 1.0 + 0.1 * jax.random.normal(k_g, (O,), jnp.float32)
    beta = 0.1 * jax.random.normal(k_b, (O,), jnp.float32)

    fwd = jax.jit(conv_block_forward)
    out = fwd(x, weight, gamma, beta)
    out = jax.block_until_ready(out)
    assert out.shape == (N, O, H // 2, W // 2), out.shape

    # Tight check vs a reference that uses the same bf16 input quantization
    # (isolates structural correctness from the intentional bf16 cast).
    xq = x.astype(jnp.bfloat16).astype(jnp.float32)
    wq = weight.astype(jnp.bfloat16).astype(jnp.float32)
    ref_q = _reference(xq, wq, gamma, beta)
    err_q = float(jnp.max(jnp.abs(out - ref_q)))
    assert err_q < 5e-3, err_q

    # Loose check vs exact f32 module math (bf16 conv inputs relax tolerance).
    ref = _reference(x, weight, gamma, beta)
    err = float(jnp.max(jnp.abs(out - ref)))
    assert err < 5e-2, err

    print("KERNEL_OK")
</pallas_src>

<mosaic_0001>
module attributes {stable_mosaic.version = 11 : i64} {
  func.func @_conv_bn_lrelu_kernel(%arg0: i32, %arg1: i32, %arg2: i32, %arg3: memref<1x48x64xbf16, #tpu.memory_space<vmem>>, %arg4: memref<8x48xbf16, #tpu.memory_space<vmem>>, %arg5: memref<8x1xf32, #tpu.memory_space<vmem>>, %arg6: memref<8x1xf32, #tpu.memory_space<vmem>>, %arg7: memref<1x8x64xf32, #tpu.memory_space<vmem>>, %arg8: memref<8x1xf32, #tpu.memory_space<vmem>>, %arg9: memref<8x1xf32, #tpu.memory_space<vmem>>, %arg10: memref<8x1xf32, #tpu.memory_space<vmem>>, %arg11: memref<8x1xf32, #tpu.memory_space<vmem>>) attributes {dimension_semantics = [#tpu.dimension_semantics<arbitrary>, #tpu.dimension_semantics<arbitrary>, #tpu.dimension_semantics<arbitrary>], iteration_bounds = array<i64: 2, 2, 1>, scalar_prefetch = 0 : i64, scratch_operands = 4 : i64, tpu.core_type = #tpu.core_type<tc>, window_params = [{transform_indices = @transform_0, window_bounds = array<i64: 1, 48, 64>}, {pipeline_mode = #tpu.pipeline_mode<synchronous>, transform_indices = @transform_1, window_bounds = array<i64: 8, 48>}, {pipeline_mode = #tpu.pipeline_mode<synchronous>, transform_indices = @transform_2, window_bounds = array<i64: 8, 1>}, {pipeline_mode = #tpu.pipeline_mode<synchronous>, transform_indices = @transform_3, window_bounds = array<i64: 8, 1>}, {transform_indices = @transform_4, window_bounds = array<i64: 1, 8, 64>}]} {
    %c0_i32 = arith.constant 0 : i32
    %0 = arith.cmpi eq, %arg1, %c0_i32 : i32
    %c0_i32_0 = arith.constant 0 : i32
    %1 = arith.cmpi eq, %arg2, %c0_i32_0 : i32
    %2 = arith.andi %0, %1 : i1
    %c1_i32 = arith.constant 1 : i32
    %3 = arith.cmpi eq, %arg1, %c1_i32 : i32
    %c0_i32_1 = arith.constant 0 : i32
    %4 = arith.cmpi eq, %arg2, %c0_i32_1 : i32
    %5 = arith.andi %3, %4 : i1
    %c0 = arith.constant 0 : index
    %c0_2 = arith.constant 0 : index
    %6 = vector.load %arg4[%c0, %c0_2] : memref<8x48xbf16, #tpu.memory_space<vmem>>, vector<8x48xbf16>
    %c0_3 = arith.constant 0 : index
    %c0_4 = arith.constant 0 : index
    %c0_5 = arith.constant 0 : index
    %7 = vector.load %arg3[%c0_3, %c0_4, %c0_5] : memref<1x48x64xbf16, #tpu.memory_space<vmem>>, vector<1x48x64xbf16>
    %8 = vector.shape_cast %7 : vector<1x48x64xbf16> to vector<48x64xbf16>
    %cst = arith.constant dense<0.000000e+00> : vector<8x64xf32>
    %9 = tpu.matmul %6, %8, %cst {dimension_numbers = #tpu.dot_dimension_numbers<[1], [0], [0], [1], [0, 0, 1, 1], [], []>} : vector<8x48xbf16>, vector<48x64xbf16>, vector<8x64xf32> -> vector<8x64xf32>
    %c0_i32_6 = arith.constant 0 : i32
    %10 = arith.cmpi eq, %arg0, %c0_i32_6 : i32
    %11 = arith.extui %10 : i1 to i32
    %c0_i32_7 = arith.constant 0 : i32
    %12 = arith.cmpi ne, %11, %c0_i32_7 : i32
    scf.if %12 {
      %16 = arith.extui %2 : i1 to i32
      %c0_i32_10 = arith.constant 0 : i32
      %17 = arith.cmpi ne, %16, %c0_i32_10 : i32
      scf.if %17 {
        %cst_22 = arith.constant 0.000000e+00 : f32
        %31 = vector.broadcast %cst_22 : f32 to vector<8x1xf32>
        %c0_23 = arith.constant 0 : index
        %c0_24 = arith.constant 0 : index
        %32 = vector.load %arg8[%c0_23, %c0_24] : memref<8x1xf32, #tpu.memory_space<vmem>>, vector<8x1xf32>
        tpu.vector_store %arg8[%c0_23, %c0_24], %31 {strides = array<i32>} : memref<8x1xf32, #tpu.memory_space<vmem>>, vector<8x1xf32>,
        %cst_25 = arith.constant 0.000000e+00 : f32
        %33 = vector.broadcast %cst_25 : f32 to vector<8x1xf32>
        %c0_26 = arith.constant 0 : index
        %c0_27 = arith.constant 0 : index
        %34 = vector.load %arg9[%c0_26, %c0_27] : memref<8x1xf32, #tpu.memory_space<vmem>>, vector<8x1xf32>
        tpu.vector_store %arg9[%c0_26, %c0_27], %33 {strides = array<i32>} : memref<8x1xf32, #tpu.memory_space<vmem>>, vector<8x1xf32>,
      } else {
      }
      %c0_11 = arith.constant 0 : index
      %c0_12 = arith.constant 0 : index
      %18 = vector.load %arg8[%c0_11, %c0_12] : memref<8x1xf32, #tpu.memory_space<vmem>>, vector<8x1xf32>
      %cst_13 = arith.constant dense<0.000000e+00> : vector<8xf32>
      %19 = vector.multi_reduction <add>, %9, %cst_13 [1] : vector<8x64xf32> to vector<8xf32>
      %20 = vector.shape_cast %19 : vector<8xf32> to vector<8x1xf32>
      %21 = arith.addf %18, %20 : vector<8x1xf32>
      %c0_14 = arith.constant 0 : index
      %c0_15 = arith.constant 0 : index
      %22 = vector.load %arg8[%c0_14, %c0_15] : memref<8x1xf32, #tpu.memory_space<vmem>>, vector<8x1xf32>
      tpu.vector_store %arg8[%c0_14, %c0_15], %21 {strides = array<i32>} : memref<8x1xf32, #tpu.memory_space<vmem>>, vector<8x1xf32>,
      %c0_16 = arith.constant 0 : index
      %c0_17 = arith.constant 0 : index
      %23 = vector.load %arg9[%c0_16, %c0_17] : memref<8x1xf32, #tpu.memory_space<vmem>>, vector<8x1xf32>
      %24 = arith.mulf %9, %9 : vector<8x64xf32>
      %cst_18 = arith.constant dense<0.000000e+00> : vector<8xf32>
      %25 = vector.multi_reduction <add>, %24, %cst_18 [1] : vector<8x64xf32> to vector<8xf32>
      %26 = vector.shape_cast %25 : vector<8xf32> to vector<8x1xf32>
      %27 = arith.addf %23, %26 : vector<8x1xf32>
      %c0_19 = arith.constant 0 : index
      %c0_20 = arith.constant 0 : index
      %28 = vector.load %arg9[%c0_19, %c0_20] : memref<8x1xf32, #tpu.memory_space<vmem>>, vector<8x1xf32>
      tpu.vector_store %arg9[%c0_19, %c0_20], %27 {strides = array<i32>} : memref<8x1xf32, #tpu.memory_space<vmem>>, vector<8x1xf32>,
      %29 = arith.extui %5 : i1 to i32
      %c0_i32_21 = arith.constant 0 : i32
      %30 = arith.cmpi ne, %29, %c0_i32_21 : i32
      scf.if %30 {
        %c0_22 = arith.constant 0 : index
        %c0_23 = arith.constant 0 : index
        %31 = vector.load %arg8[%c0_22, %c0_23] : memref<8x1xf32, #tpu.memory_space<vmem>>, vector<8x1xf32>
        %cst_24 = arith.constant 7.812500e-03 : f32
        %32 = vector.broadcast %cst_24 : f32 to vector<8x1xf32>
        %33 = arith.mulf %31, %32 : vector<8x1xf32>
        %c0_25 = arith.constant 0 : index
        %c0_26 = arith.constant 0 : index
        %34 = vector.load %arg9[%c0_25, %c0_26] : memref<8x1xf32, #tpu.memory_space<vmem>>, vector<8x1xf32>
        %cst_27 = arith.constant 7.812500e-03 : f32
        %35 = vector.broadcast %cst_27 : f32 to vector<8x1xf32>
        %36 = arith.mulf %34, %35 : vector<8x1xf32>
        %37 = arith.mulf %33, %33 : vector<8x1xf32>
        %38 = arith.subf %36, %37 : vector<8x1xf32>
        %cst_28 = arith.constant 0.000000e+00 : f32
        %39 = vector.broadcast %cst_28 : f32 to vector<8x1xf32>
        %40 = arith.maximumf %38, %39 : vector<8x1xf32>
        %c0_29 = arith.constant 0 : index
        %c0_30 = arith.constant 0 : index
        %41 = vector.load %arg5[%c0_29, %c0_30] : memref<8x1xf32, #tpu.memory_space<vmem>>, vector<8x1xf32>
        %cst_31 = arith.constant 9.99999974E-6 : f32
        %42 = vector.broadcast %cst_31 : f32 to vector<8x1xf32>
        %43 = arith.addf %40, %42 : vector<8x1xf32>
        %44 = math.rsqrt %43 : vector<8x1xf32>
        %45 = arith.mulf %41, %44 : vector<8x1xf32>
        %c0_32 = arith.constant 0 : index
        %c0_33 = arith.constant 0 : index
        %46 = vector.load %arg10[%c0_32, %c0_33] : memref<8x1xf32, #tpu.memory_space<vmem>>, vector<8x1xf32>
        tpu.vector_store %arg10[%c0_32, %c0_33], %45 {strides = array<i32>} : memref<8x1xf32, #tpu.memory_space<vmem>>, vector<8x1xf32>,
        %c0_34 = arith.constant 0 : index
        %c0_35 = arith.constant 0 : index
        %47 = vector.load %arg6[%c0_34, %c0_35] : memref<8x1xf32, #tpu.memory_space<vmem>>, vector<8x1xf32>
        %48 = arith.mulf %33, %45 : vector<8x1xf32>
        %49 = arith.subf %47, %48 : vector<8x1xf32>
        %c0_36 = arith.constant 0 : index
        %c0_37 = arith.constant 0 : index
        %50 = vector.load %arg11[%c0_36, %c0_37] : memref<8x1xf32, #tpu.memory_space<vmem>>, vector<8x1xf32>
        tpu.vector_store %arg11[%c0_36, %c0_37], %49 {strides = array<i32>} : memref<8x1xf32, #tpu.memory_space<vmem>>, vector<8x1xf32>,
      } else {
      }
    } else {
    }
    %c1_i32_8 = arith.constant 1 : i32
    %13 = arith.cmpi eq, %arg0, %c1_i32_8 : i32
    %14 = arith.extui %13 : i1 to i32
    %c0_i32_9 = arith.constant 0 : i32
    %15 = arith.cmpi ne, %14, %c0_i32_9 : i32
    scf.if %15 {
      %c0_10 = arith.constant 0 : index
      %c0_11 = arith.constant 0 : index
      %16 = vector.load %arg10[%c0_10, %c0_11] : memref<8x1xf32, #tpu.memory_space<vmem>>, vector<8x1xf32>
      %17 = vector.broadcast %16 : vector<8x1xf32> to vector<8x64xf32>
      %18 = arith.mulf %9, %17 : vector<8x64xf32>
      %c0_12 = arith.constant 0 : index
      %c0_13 = arith.constant 0 : index
      %19 = vector.load %arg11[%c0_12, %c0_13] : memref<8x1xf32, #tpu.memory_space<vmem>>, vector<8x1xf32>
      %20 = vector.broadcast %19 : vector<8x1xf32> to vector<8x64xf32>
      %21 = arith.addf %18, %20 : vector<8x64xf32>
      %cst_14 = arith.constant 0.000000e+00 : f32
      %22 = vector.broadcast %cst_14 : f32 to vector<8x64xf32>
      %23 = arith.cmpf oge, %21, %22 : vector<8x64xf32>
      %cst_15 = arith.constant 0.00999999977 : f32
      %24 = vector.broadcast %cst_15 : f32 to vector<8x64xf32>
      %25 = arith.mulf %24, %21 : vector<8x64xf32>
      %26 = arith.select %23, %21, %25 : vector<8x64xi1>, vector<8x64xf32>
      %c0_16 = arith.constant 0 : index
      %c0_17 = arith.constant 0 : index
      %c0_18 = arith.constant 0 : index
      %27 = vector.load %arg7[%c0_16, %c0_17, %c0_18] : memref<1x8x64xf32, #tpu.memory_space<vmem>>, vector<1x8x64xf32>
      %28 = vector.shape_cast %27 : vector<1x8x64xf32> to vector<8x64xf32>
      %29 = vector.shape_cast %26 : vector<8x64xf32> to vector<1x8x64xf32>
      tpu.vector_store %arg7[%c0_16, %c0_17, %c0_18], %29 {strides = array<i32>} : memref<1x8x64xf32, #tpu.memory_space<vmem>>, vector<1x8x64xf32>,
    } else {
    }
    return
  }
  func.func @transform_0(%arg0: i32, %arg1: i32, %arg2: i32) -> (i32, i32, i32) {
    %c0_i32 = arith.constant 0 : i32
    %c0_i32_0 = arith.constant 0 : i32
    return %arg1, %c0_i32, %arg2 : i32, i32, i32
  }
  func.func @transform_1(%arg0: i32, %arg1: i32, %arg2: i32) -> (i32, i32) {
    %c0_i32 = arith.constant 0 : i32
    %c0_i32_0 = arith.constant 0 : i32
    %c0_i32_1 = arith.constant 0 : i32
    return %c0_i32, %c0_i32_0 : i32, i32
  }
  func.func @transform_2(%arg0: i32, %arg1: i32, %arg2: i32) -> (i32, i32) {
    %c0_i32 = arith.constant 0 : i32
    %c0_i32_0 = arith.constant 0 : i32
    %c0_i32_1 = arith.constant 0 : i32
    return %c0_i32, %c0_i32_0 : i32, i32
  }
  func.func @transform_3(%arg0: i32, %arg1: i32, %arg2: i32) -> (i32, i32) {
    %c0_i32 = arith.constant 0 : i32
    %c0_i32_0 = arith.constant 0 : i32
    %c0_i32_1 = arith.constant 0 : i32
    return %c0_i32, %c0_i32_0 : i32, i32
  }
  func.func @transform_4(%arg0: i32, %arg1: i32, %arg2: i32) -> (i32, i32, i32) {
    %0 = arith.muli %arg1, %arg0 : i32
    %1 = arith.muli %arg2, %arg0 : i32
    %c0_i32 = arith.constant 0 : i32
    %c0_i32_0 = arith.constant 0 : i32
    return %0, %c0_i32, %1 : i32, i32, i32
  }
}

</mosaic_0001>

<llo_original>
// kernel: conv_block_forward.1
$region0: #{conv_block_forward.1}
  #allocation0 [shape = 'u32[]', space=smem, size = 0x4, offset = 0x4, fixed_abs, tag = 'smem constant byte address 0x4 - core index']
  #allocation1 [shape = 'u32[72,128]{1,0:T(1,128)}', space=vmem, size = 0x9000, scoped, tag = 'internal scratch']
  #allocation2 [shape = 'f32[8,1]{1,0:T(8,128)}', space=vmem, size = 0x1000, scoped, tag = 'scratch operand']
  #allocation3 [shape = 'f32[8,1]{1,0:T(8,128)}', space=vmem, size = 0x1000, scoped, tag = 'scratch operand']
  #allocation4 [shape = 'f32[8,1]{1,0:T(8,128)}', space=vmem, size = 0x1000, scoped, tag = 'scratch operand']
  #allocation5 [shape = 'f32[8,1]{1,0:T(8,128)}', space=vmem, size = 0x1000, scoped, tag = 'scratch operand']
  %s0 = inlined_call_operand.vmem [shape: bf16[2,48,64], index: 0, kind: input, shape index: {}]
  %s1 = inlined_call_operand.vmem [shape: bf16[8,48], index: 1, kind: input, shape index: {}]
  %s2 = inlined_call_operand.vmem [shape: f32[8,1], index: 2, kind: input, shape index: {}]
  %s3 = inlined_call_operand.vmem [shape: f32[8,1], index: 3, kind: input, shape index: {}]
  %s4 = inlined_call_operand.vmem [shape: f32[2,8,64], index: 4, kind: output, shape index: {}]
  %s5 = sld [smem:[#allocation0]]
  $region65: #{conv_block_forward.1} parent=0
    _
  %s7 = ssub.s32 1, %s5
  %s8 = scalar_select 0, %s7, %s5
  loop: start=0, step=1, limit=6
  $region2: #{conv_block_forward.1} parent=0 // loop_pre_header
    _
  $region3: #{conv_block_forward.1} parent=0 // loop_header
    %s10 = sphi 0, %s14
    %p11 = scmp.ge.s32.totalorder %s10, 6
    %s17 = sphi 0, %s36
    %s18 = sphi 0, %s32
    %s19 = sphi 0, %s28
    %s20 = sphi 0, %s17
    %s21 = sphi 0, %s18
    %s22 = sphi 0, %s19
    %s23 = sphi 0, %s20
    %s24 = sphi 0, %s21
    %s25 = sphi 0, %s22
    %s41 = sphi 0, %s43
    %s44 = sphi 0, %s41
    %s45 = sphi 0, %s44
    %s61 = sphi 0, %s45
    %s65 = sphi 0, %s65
    %s67 = sphi 0, %s65
    %s68 = sphi 0, %s67
    %s82 = sphi 0, %s68
    %s86 = sphi 0, %s86
    %s88 = sphi 0, %s86
    %s89 = sphi 0, %s88
    %s103 = sphi 0, %s89
    %s107 = sphi 0, %s107
    %s109 = sphi 0, %s107
    %s110 = sphi 0, %s109
    %s124 = sphi 0, %s110
    %s136 = sphi 0, %s138
    %s139 = sphi 0, %s136
    %s140 = sphi 0, %s139
    %s156 = sphi 0, %s140
  $region4: #{conv_block_forward.1} parent=0 // loop_header_branch
    %13 = sbr.rel (%p11) target = $region8
  $region5: #{conv_block_forward.1} parent=0 // loop_body
    %s15 = ssub.s32 %s10, 1
    %s16 = ssub.s32 %s10, 2
    %s26 = sadd.s32 1, %s19
    %p27 = scmp.ge.s32.totalorder %s26, 1
    %s28 = scalar_select %p27, 0, %s26
    %s29 = sadd.s32 1, %s18
    %s30 = scalar_select %p27, %s29, %s18
    %p31 = scmp.ge.s32.totalorder %s30, 2
    %s32 = scalar_select %p31, 0, %s30
    %s33 = sadd.s32 1, %s17
    %s34 = scalar_select %p31, %s33, %s17
    %p35 = scmp.ge.s32.totalorder %s34, 2
    %s36 = scalar_select %p35, 0, %s34
    %s37 = ssub.s32 %s18, %s32
    %s38 = ssub.s32 %s19, %s28
    %s39 = sor.u32 %s37, %s38
    %p40 = scmp.eq.s32.totalorder %s39, 0
    %s42 = sadd.s32 %s41, 1
    %s43 = scalar_select %p40, %s41, %s42
    %p46 = pneg %p40
    %p47 = scmp.eq.s32.totalorder %s10, 3
    %p48 = por %p46, %p47
    %p49 = scmp.ne.s32.totalorder %s41, %s44
    %p50 = scmp.eq.s32.totalorder %s10, 0
    %p51 = por %p49, %p50
    %p52 = scmp.ne.s32.totalorder %s41, %s44
    %p53 = scmp.eq.s32.totalorder %s15, 3
    %p54 = por %p52, %p53
    %p55 = scmp.ne.s32.totalorder %s44, %s45
    %p56 = scmp.eq.s32.totalorder %s15, 0
    %p57 = por %p55, %p56
    %p58 = scmp.ne.s32.totalorder %s44, %s45
    %p59 = scmp.eq.s32.totalorder %s16, 3
    %p60 = por %p58, %p59
    %p62 = scmp.ne.s32.totalorder %s45, %s61
    %p63 = scmp.eq.s32.totalorder %s16, 0
    %p64 = por %p62, %p63
    %s66 = sadd.s32 %s65, 1
    %p69 = scmp.eq.s32.totalorder %s10, 3
    %p70 = scmp.ne.s32.totalorder %s65, %s67
    %p71 = scmp.eq.s32.totalorder %s10, 0
    %p72 = por %p70, %p71
    %p73 = scmp.ne.s32.totalorder %s65, %s67
    %p74 = scmp.eq.s32.totalorder %s15, 3
    %p75 = por %p73, %p74
    %p76 = scmp.ne.s32.totalorder %s67, %s68
    %p77 = scmp.eq.s32.totalorder %s15, 0
    %p78 = por %p76, %p77
    %p79 = scmp.ne.s32.totalorder %s67, %s68
    %p80 = scmp.eq.s32.totalorder %s16, 3
    %p81 = por %p79, %p80
    %p83 = scmp.ne.s32.totalorder %s68, %s82
    %p84 = scmp.eq.s32.totalorder %s16, 0
    %p85 = por %p83, %p84
    %s87 = sadd.s32 %s86, 1
    %p90 = scmp.eq.s32.totalorder %s10, 3
    %p91 = scmp.ne.s32.totalorder %s86, %s88
    %p92 = scmp.eq.s32.totalorder %s10, 0
    %p93 = por %p91, %p92
    %p94 = scmp.ne.s32.totalorder %s86, %s88
    %p95 = scmp.eq.s32.totalorder %s15, 3
    %p96 = por %p94, %p95
    %p97 = scmp.ne.s32.totalorder %s88, %s89
    %p98 = scmp.eq.s32.totalorder %s15, 0
    %p99 = por %p97, %p98
    %p100 = scmp.ne.s32.totalorder %s88, %s89
    %p101 = scmp.eq.s32.totalorder %s16, 3
    %p102 = por %p100, %p101
    %p104 = scmp.ne.s32.totalorder %s89, %s103
    %p105 = scmp.eq.s32.totalorder %s16, 0
    %p106 = por %p104, %p105
    %s108 = sadd.s32 %s107, 1
    %p111 = scmp.eq.s32.totalorder %s10, 3
    %p112 = scmp.ne.s32.totalorder %s107, %s109
    %p113 = scmp.eq.s32.totalorder %s10, 0
    %p114 = por %p112, %p113
    %p115 = scmp.ne.s32.totalorder %s107, %s109
    %p116 = scmp.eq.s32.totalorder %s15, 3
    %p117 = por %p115, %p116
    %p118 = scmp.ne.s32.totalorder %s109, %s110
    %p119 = scmp.eq.s32.totalorder %s15, 0
    %p120 = por %p118, %p119
    %p121 = scmp.ne.s32.totalorder %s109, %s110
    %p122 = scmp.eq.s32.totalorder %s16, 3
    %p123 = por %p121, %p122
    %p125 = scmp.ne.s32.totalorder %s110, %s124
    %p126 = scmp.eq.s32.totalorder %s16, 0
    %p127 = por %p125, %p126
    %s128 = smul.u32 %s18, %s17
    %s129 = smul.u32 %s19, %s17
    %s130 = smul.u32 %s32, %s36
    %s131 = smul.u32 %s28, %s36
    %s132 = ssub.s32 %s128, %s130
    %s133 = ssub.s32 %s129, %s131
    %s134 = sor.u32 %s132, %s133
    %p135 = scmp.eq.s32.totalorder %s134, 0
    %s137 = sadd.s32 %s136, 1
    %s138 = scalar_select %p135, %s136, %s137
    %p141 = pneg %p135
    %p142 = scmp.eq.s32.totalorder %s10, 3
    %p143 = por %p141, %p142
    %p144 = scmp.ne.s32.totalorder %s136, %s139
    %p145 = scmp.eq.s32.totalorder %s10, 0
    %p146 = por %p144, %p145
    %p147 = scmp.ne.s32.totalorder %s136, %s139
    %p148 = scmp.eq.s32.totalorder %s15, 3
    %p149 = por %p147, %p148
    %p150 = scmp.ne.s32.totalorder %s139, %s140
    %p151 = scmp.eq.s32.totalorder %s15, 0
    %p152 = por %p150, %p151
    %p153 = scmp.ne.s32.totalorder %s139, %s140
    %p154 = scmp.eq.s32.totalorder %s16, 3
    %p155 = por %p153, %p154
    %p157 = scmp.ne.s32.totalorder %s140, %s156
    %p158 = scmp.eq.s32.totalorder %s16, 0
    %p159 = por %p157, %p158
    %p160 = scmp.le.s32.totalorder 1, %s10
    %p161 = scmp.lt.s32.totalorder %s10, 5
    %p162 = pnand %p160, %p161
    %p163 = pneg %p162
    // Predicated region
    $region9: #{conv_block_forward.1} parent=5 // pred_check
      _
    $region10: #{conv_block_forward.1} parent=5 // pred_check_branch
      %165 = sbr.rel (%p162) target = $region12
    $region11: #{conv_block_forward.1} parent=5 // pred_region
      %s166 = ssub.s32 %s10, 1
      // Predicated region
      $region13: #{conv_block_forward.1} parent=11 // pred_check
        %p167 = pneg %p78
      $region14: #{conv_block_forward.1} parent=11 // pred_check_branch
        %169 = sbr.rel (%p167) target = $region16
      $region15: #{conv_block_forward.1} parent=11 // pred_region
        _
      $region16: #{conv_block_forward.1} parent=11 // pred_fallthru
        _
      // Predicated region
      $region17: #{conv_block_forward.1} parent=11 // pred_check
        %p170 = pneg %p99
      $region18: #{conv_block_forward.1} parent=11 // pred_check_branch
        %172 = sbr.rel (%p170) target = $region20
      $region19: #{conv_block_forward.1} parent=11 // pred_region
        _
      $region20: #{conv_block_forward.1} parent=11 // pred_fallthru
        _
      // Predicated region
      $region21: #{conv_block_forward.1} parent=11 // pred_check
        %p173 = pneg %p120
      $region22: #{conv_block_forward.1} parent=11 // pred_check_branch
        %175 = sbr.rel (%p173) target = $region24
      $region23: #{conv_block_forward.1} parent=11 // pred_region
        _
      $region24: #{conv_block_forward.1} parent=11 // pred_fallthru
        _
    $region12: #{conv_block_forward.1} parent=5 // pred_fallthru
      _
    %p176 = scmp.lt.s32.totalorder %s10, 4
    // Predicated region
    $region25: #{conv_block_forward.1} parent=5 // pred_check
      %p177 = pneg %p176
    $region26: #{conv_block_forward.1} parent=5 // pred_check_branch
      %179 = sbr.rel (%p177) target = $region28
    $region27: #{conv_block_forward.1} parent=5 // pred_region
      // Predicated region
      $region29: #{conv_block_forward.1} parent=27 // pred_check
        %p180 = pneg %p51
      $region30: #{conv_block_forward.1} parent=27 // pred_check_branch
        %182 = sbr.rel (%p180) target = $region32
      $region31: #{conv_block_forward.1} parent=27 // pred_region
        %p183 = scmp.lt.s32.totalorder %s18, 1
        %s184 = scalar_select %p183, %s18, 1
        %p185 = scmp.lt.s32.totalorder %s19, 0
        %s186 = scalar_select %p185, %s19, 0
        %s187 = smul.addr %s184, 6
        %s188 = sadd.s32 %s186, %s187
        %s189 = smul.addr %s188, 4
        %s190 = scalar_lea.vmem %s0, %s189
      $region32: #{conv_block_forward.1} parent=27 // pred_fallthru
        _
    $region28: #{conv_block_forward.1} parent=5 // pred_fallthru
      _
    %p191 = scmp.le.s32.totalorder 1, %s10
    %p192 = scmp.lt.s32.totalorder %s10, 5
    %p193 = pnand %p191, %p192
    %p194 = pneg %p193
    // Predicated region
    $region33: #{conv_block_forward.1} parent=5 // pred_check
      _
    $region34: #{conv_block_forward.1} parent=5 // pred_check_branch
      %196 = sbr.rel (%p193) target = $region36
    $region35: #{conv_block_forward.1} parent=5 // pred_region
      %s197 = ssub.s32 %s10, 1
      %p198 = scmp.lt.s32.totalorder %s21, 1
      %s199 = scalar_select %p198, %s21, 1
      %p200 = scmp.lt.s32.totalorder %s22, 0
      %s201 = scalar_select %p200, %s22, 0
      %s202 = smul.addr %s199, 6
      %s203 = sadd.s32 %s201, %s202
      %s204 = smul.addr %s203, 4
      %s205 = scalar_lea.vmem %s0, %s204
      %p206 = pneg %p57
      %p207 = pneg %p54
      %p208 = pneg %p78
      %p209 = pneg %p75
      %p210 = pneg %p99
      %p211 = pneg %p96
      %p212 = pneg %p120
      %p213 = pneg %p117
      %p214 = pneg %p152
      %p215 = pneg %p149
      %s216 = smul.u32 %s21, %s20
      %s217 = smul.u32 %s22, %s20
      %p218 = scmp.lt.s32.totalorder %s216, 1
      %s219 = scalar_select %p218, %s216, 1
      %p220 = scmp.lt.s32.totalorder %s217, 0
      %s221 = scalar_select %p220, %s217, 0
      %s222 = sadd.s32 %s221, %s219
      %s223 = smul.addr %s222, 8
      %s224 = scalar_lea.vmem %s4, %s223
      %p225 = scmp.lt.s32.totalorder %s21, 1
      %s226 = scalar_select %p225, %s21, 1
      %p227 = scmp.lt.s32.totalorder %s22, 0
      %s228 = scalar_select %p227, %s22, 0
      %s229 = smul.addr %s226, 6
      %s230 = sadd.s32 %s228, %s229
      %s231 = smul.addr %s230, 4
      %s232 = scalar_lea.vmem %s0, %s231
      %s233 = smul.u32 %s21, %s20
      %s234 = smul.u32 %s22, %s20
      %p235 = scmp.lt.s32.totalorder %s233, 1
      %s236 = scalar_select %p235, %s233, 1
      %p237 = scmp.lt.s32.totalorder %s234, 0
      %s238 = scalar_select %p237, %s234, 0
      %s239 = sadd.s32 %s238, %s236
      %s240 = smul.addr %s239, 8
      %s241 = scalar_lea.vmem %s4, %s240
      %s242 = smul.u32 %s21, %s20
      %s243 = smul.u32 %s22, %s20
      %p245 = scmp.eq.s32.totalorder %s21, 0
      %p246 = scmp.eq.s32.totalorder %s22, 0
      %p247 = pnand %p245, %p246
      %p248 = pneg %p247
      %p249 = scmp.eq.s32.totalorder %s21, 1
      %p250 = pnand %p249, %p246
      %p251 = pneg %p250
      %v252 = vld [vmem:[%s1] sm:$0xf]
      %v253 = vld [vmem:[%s232] sm:$0xf]
      %v254 = vld [vmem:[%s232 + $0x4] sm:$0xf]
      %v255 = vld [vmem:[%s232 + $0x8] sm:$0xf]
      %v256 = vld [vmem:[%s232 + $0xc] sm:$0xf]
      %v257 = vld [vmem:[%s232 + $0x10] sm:$0xf]
      %v258 = vld [vmem:[%s232 + $0x14] sm:$0xf]
      %v265 = vunpack.c.l.b16 %v253
      %v266 = vunpack.c.l.b16 %v254
      %v267 = vunpack.c.l.b16 %v255
      %v268 = vunpack.c.l.b16 %v256
      %v269 = vunpack.c.l.b16 %v257
      %v270 = vunpack.c.l.b16 %v258
      %v271 = vpack.c.b16 %v266, %v265
      %v272 = vpack.c.b16 %v268, %v267
      %v273 = vpack.c.b16 %v270, %v269
      %vm277 = vcmask 392192
      %v279 = vsel %vm277, %v252, 0
      %281 = vmatpush.bf16.msra.mxu0 0
      %282 = vmatpush.bf16.msra.mxu0 0
      %283 = vmatpush.bf16.msra.mxu0 0
      %284 = vmatpush.bf16.msra.mxu0 0
      %285 = vmatpush.bf16.msra.mxu0 0
      %286 = vmatpush.bf16.msra.mxu0 %v273
      %287 = vmatpush.bf16.msra.mxu0 %v272
      %288 = vmatpush.bf16.msra.mxu0 %v271
      %289 = vmatmul.bf16.gmra.mxu0 %v279
      %v290 = vpop.f32.mrf.mxu0
      %v291 = vadd.f32 0.0, %v290
      %v292 = vpop.f32.mrf.mxu0
      %293 = vdwg.mxu0
      %p294 = scmp.eq.s32.totalorder %s20, 0
      // Predicated region
      $region37: #{conv_block_forward.1} parent=35 // pred_check
        %p295 = pneg %p294
      $region38: #{conv_block_forward.1} parent=35 // pred_check_branch
        %297 = sbr.rel (%p295) target = $region40
      $region39: #{conv_block_forward.1} parent=35 // pred_region
        // Predicated region
        $region41: #{conv_block_forward.1} parent=39 // pred_check
          _
        $region42: #{conv_block_forward.1} parent=39 // pred_check_branch
          %299 = sbr.rel (%p247) target = $region44
        $region43: #{conv_block_forward.1} parent=39 // pred_region
          %vm300 = vcmask 7168
          %301 = vst.msk [vmem:[#allocation2] sm:$0xff] %vm300, 0.0
          %302 = vst.msk [vmem:[#allocation3] sm:$0xff] %vm300, 0.0
        $region44: #{conv_block_forward.1} parent=39 // pred_fallthru
          _
        %v303 = vld [vmem:[#allocation2] sm:$0xff]
        %vm304 = vcmask 523264
        %v305 = vsel %vm304, %v291, 0.0
        %306 = vadd.xlane.f32.xlu0 %v305
        %v307 = vpop.xlane.xlu0 %306
        %v308 = vadd.f32 %v303, %v307
        %vm309 = vcmask 7168
        %310 = vst.msk [vmem:[#allocation2] sm:$0xff] %vm309, %v308
        %v311 = vld [vmem:[#allocation3] sm:$0xff]
        %v312 = vmul.f32 %v291, %v291
        %v313 = vsel %vm304, %v312, 0.0
        %314 = vadd.xlane.f32.xlu0 %v313
        %v315 = vpop.xlane.xlu0 %314
        %v316 = vadd.f32 %v311, %v315
        %317 = vst.msk [vmem:[#allocation3] sm:$0xff] %vm309, %v316
        // Predicated region
        $region45: #{conv_block_forward.1} parent=39 // pred_check
          _
        $region46: #{conv_block_forward.1} parent=39 // pred_check_branch
          %319 = sbr.rel (%p250) target = $region48
        $region47: #{conv_block_forward.1} parent=39 // pred_region
          %v320 = vld [vmem:[#allocation2] sm:$0xff]
          %v321 = vmul.f32 %v320, 0.0078125
          %v322 = vld [vmem:[#allocation3] sm:$0xff]
          %v323 = vmul.f32 %v322, 0.0078125
          %v324 = vmul.f32 %v321, %v321
          %v325 = vsub.f32 %v323, %v324
          %v326 = vmax.f32 %v325, 0.0
          %v327 = vld [vmem:[%s2] sm:$0xff]
          %v328 = vadd.f32 %v326, 1e-05
          %v329 = vrsqrt.pop %v328
          %v330 = vmul.f32 %v329, %v328
          %v331 = vmul.f32 %v330, %v329
          %v332 = vmul.f32 0.5, %v331
          %v333 = vsub.f32 1.5, %v332
          %v334 = vmul.f32 %v329, %v333
          %vm335 = vweird.f32 %v328
          %vm336 = vweird.f32 %v329
          %vm337 = vmor %vm335, %vm336
          %v338 = vsel %vm337, %v329, %v334
          %v339 = vmul.f32 %v327, %v338
          %340 = vst.msk [vmem:[#allocation4] sm:$0xff] %vm309, %v339
          %v341 = vld [vmem:[%s3] sm:$0xff]
          %v342 = vmul.f32 %v321, %v339
          %v343 = vsub.f32 %v341, %v342
          %344 = vst.msk [vmem:[#allocation5] sm:$0xff] %vm309, %v343
        $region48: #{conv_block_forward.1} parent=39 // pred_fallthru
          _
      $region40: #{conv_block_forward.1} parent=35 // pred_fallthru
        _
      %p345 = scmp.eq.s32.totalorder %s20, 1
      // Predicated region
      $region49: #{conv_block_forward.1} parent=35 // pred_check
        %p346 = pneg %p345
      $region50: #{conv_block_forward.1} parent=35 // pred_check_branch
        %348 = sbr.rel (%p346) target = $region52
      $region51: #{conv_block_forward.1} parent=35 // pred_region
        %v349 = vld [vmem:[#allocation4] sm:$0xff]
        %351 = vset.pattern.permute.xlu0 0
        %352 = vperm.xlu0 %351, %v349
        %v353 = vpop.permute.xlu0 %352
        %v355 = vmul.f32 %v291, %v353
        %v356 = vld [vmem:[#allocation5] sm:$0xff]
        %358 = vset.pattern.permute.xlu0 0
        %359 = vperm.xlu0 %358, %v356
        %v360 = vpop.permute.xlu0 %359
        %v362 = vadd.f32 %v355, %v360
        %vm363 = vcmp.ge.f32.partialorder %v362, 0.0
        %v364 = vmul.f32 %v362, 0.01
        %v365 = vsel %vm363, %v362, %v364
        %vm366 = vcmask 523264
        %367 = vst.msk [vmem:[%s241] sm:$0xff] %vm366, %v365
      $region52: #{conv_block_forward.1} parent=35 // pred_fallthru
        _
      %s368 = smul.u32 %s21, %s20
      %s369 = smul.u32 %s22, %s20
      %p370 = scmp.lt.s32.totalorder %s368, 1
      %s371 = scalar_select %p370, %s368, 1
      %p372 = scmp.lt.s32.totalorder %s369, 0
      %s373 = scalar_select %p372, %s369, 0
      %s374 = sadd.s32 %s373, %s371
      %s375 = smul.addr %s374, 8
      %s376 = scalar_lea.vmem %s4, %s375
      // Predicated region
      $region53: #{conv_block_forward.1} parent=35 // pred_check
        %p377 = pneg %p149
      $region54: #{conv_block_forward.1} parent=35 // pred_check_branch
        %379 = sbr.rel (%p377) target = $region56
      $region55: #{conv_block_forward.1} parent=35 // pred_region
        %s380 = smul.u32 %s21, %s20
        %s381 = smul.u32 %s22, %s20
      $region56: #{conv_block_forward.1} parent=35 // pred_fallthru
        _
    $region36: #{conv_block_forward.1} parent=5 // pred_fallthru
      _
    %p382 = scmp.le.s32.totalorder 2, %s10
    // Predicated region
    $region57: #{conv_block_forward.1} parent=5 // pred_check
      %p383 = pneg %p382
    $region58: #{conv_block_forward.1} parent=5 // pred_check_branch
      %385 = sbr.rel (%p383) target = $region60
    $region59: #{conv_block_forward.1} parent=5 // pred_region
      %s386 = ssub.s32 %s10, 2
      // Predicated region
      $region61: #{conv_block_forward.1} parent=59 // pred_check
        %p387 = pneg %p155
      $region62: #{conv_block_forward.1} parent=59 // pred_check_branch
        %389 = sbr.rel (%p387) target = $region64
      $region63: #{conv_block_forward.1} parent=59 // pred_region
        %s390 = smul.u32 %s24, %s23
        %s391 = smul.u32 %s25, %s23
        %p392 = scmp.lt.s32.totalorder %s390, 1
        %s393 = scalar_select %p392, %s390, 1
        %p394 = scmp.lt.s32.totalorder %s391, 0
        %s395 = scalar_select %p394, %s391, 0
        %s396 = sadd.s32 %s395, %s393
        %s397 = smul.addr %s396, 8
        %s398 = scalar_lea.vmem %s4, %s397
      $region64: #{conv_block_forward.1} parent=59 // pred_fallthru
        _
    $region60: #{conv_block_forward.1} parent=5 // pred_fallthru
      _
  $region6: #{conv_block_forward.1} parent=0 // loop_footer
    %s14 = sadd.s32 1, %s10
  $region7: #{conv_block_forward.1} parent=0 // loop_footer_branch
    %9 = sbr.rel target = $region3
  $region8: #{conv_block_forward.1} parent=0 // loop_exit
    _

</llo_original>
